<compile_context>
chip_gen: v6e
topology: v6e:2x2x1
jax: 0.10.0
libtpu: 0.0.40
codegen_flags: <defaults>
</compile_context>

<pallas_src>
import functools

import jax
import jax.numpy as jnp
from jax.experimental import pallas as pl
from jax.experimental.pallas import tpu as pltpu

NUM_FEATURES = 32
BATCH = 8
BN_EPS = 1e-5
LANE = 128
SUBLANE = 8


def _round_up(x, m):
    return (x + m - 1) // m * m


def neuralnet_kernel(x_ref, w1_ref, b1_ref, gamma_ref, beta_ref, w2_ref,
                     nrows_ref, b2_ref, o_ref):
    x = x_ref[...]            # [Bp, 128]  zero-padded features/rows
    w1 = w1_ref[...]          # [128, 128] (in x out), zero-padded
    b1 = b1_ref[...]          # [1, 128]   padded lanes are 0
    gamma = gamma_ref[...]    # [1, 128]   padded lanes are 0
    beta = beta_ref[...]      # [1, 128]   padded lanes are 0

    # Valid-row mask for BN statistics (hoisted: computed once, used twice).
    n = nrows_ref[0]                                         # true batch size
    inv_n = 1.0 / n.astype(jnp.float32)
    row_ids = jax.lax.broadcasted_iota(jnp.int32, x.shape, 0)
    row_mask = (row_ids < n).astype(jnp.float32)              # [Bp, 128]

    def fc_relu_bn(h):
        # Linear + ReLU (MXU matmul, f32 accumulate).
        h = jnp.dot(h, w1, preferred_element_type=jnp.float32) + b1
        h = jnp.maximum(h, 0.0)
        # BatchNorm1d, training mode, biased variance over the true batch only.
        hm = h * row_mask
        mean = jnp.sum(hm, axis=0, keepdims=True) * inv_n          # [1, 128]
        ex2 = jnp.sum(hm * hm, axis=0, keepdims=True) * inv_n      # [1, 128]
        var = ex2 - mean * mean
        # Fused BN affine: 2 VPU ops per element instead of 4; rsqrt -> EUP.
        scale = gamma * jax.lax.rsqrt(var + BN_EPS)
        shift = beta - mean * scale
        return h * scale + shift                                   # padded lanes stay 0

    h = fc_relu_bn(x)
    h = fc_relu_bn(h)   # same fc_layer / bn_layer applied a second time

    # last_layer folded into a lane-dense [128,128] weight (real weight in
    # column 0); scalar bias comes from SMEM.  Output is a [Bp,128] slab so
    # every store is an unmasked, lane-dense vst.
    out = jnp.dot(h, w2_ref[...], preferred_element_type=jnp.float32) + b2_ref[0]
    o_ref[...] = out.astype(o_ref.dtype)


@jax.jit
def neuralnet_forward(x, w1_t, b1, gamma, beta, w2_t, b2):
    B, F = x.shape
    Bp = _round_up(max(B, SUBLANE), SUBLANE)   # sublane-aligned batch
    Fp = _round_up(F, LANE)                    # lane-dense features

    # Zero-pad: padded gamma/beta/b1 columns = 0 keep dead lanes exactly 0
    # through ReLU/BN; padded w2 rows = 0 keep them out of the final matmul.
    xp = jnp.zeros((Bp, Fp), jnp.float32).at[:B, :F].set(x)
    w1p = jnp.zeros((Fp, Fp), jnp.float32).at[:F, :F].set(w1_t)
    b1p = jnp.zeros((1, Fp), jnp.float32).at[:, :F].set(b1)
    gp = jnp.zeros((1, Fp), jnp.float32).at[:, :F].set(gamma)
    bp = jnp.zeros((1, Fp), jnp.float32).at[:, :F].set(beta)
    w2p = jnp.zeros((Fp, Fp), jnp.float32).at[:F, 0:1].set(w2_t)

    nrows = jnp.array([B], jnp.int32)               # SMEM scalar
    b2s = jnp.reshape(b2, (1,)).astype(jnp.float32)  # SMEM scalar

    vmem = pl.BlockSpec(memory_space=pltpu.MemorySpace.VMEM)
    smem = pl.BlockSpec(memory_space=pltpu.MemorySpace.SMEM)

    out = pl.pallas_call(
        neuralnet_kernel,
        out_shape=jax.ShapeDtypeStruct((Bp, Fp), jnp.float32),
        in_specs=[vmem, vmem, vmem, vmem, vmem, vmem, smem, smem],
        out_specs=vmem,
    )(xp, w1p, b1p, gp, bp, w2p, nrows, b2s)

    return out[:B, 0:1]   # real result lives in column 0


def init_params(key, num_features):
    # Deterministic init mimicking PyTorch nn.Linear defaults:
    # U(-1/sqrt(fan_in), 1/sqrt(fan_in)); BatchNorm gamma=1, beta=0.
    k1, k2, k3, k4 = jax.random.split(key, 4)
    bound1 = 1.0 / jnp.sqrt(num_features)
    w1 = jax.random.uniform(k1, (num_features, num_features),
                            minval=-bound1, maxval=bound1, dtype=jnp.float32)
    b1 = jax.random.uniform(k2, (1, num_features),
                            minval=-bound1, maxval=bound1, dtype=jnp.float32)
    w1_t = w1.T                                   # store as (in, out)
    gamma = jnp.ones((1, num_features), jnp.float32)
    beta = jnp.zeros((1, num_features), jnp.float32)
    w2 = jax.random.uniform(k3, (1, num_features),
                            minval=-bound1, maxval=bound1, dtype=jnp.float32)
    b2 = jax.random.uniform(k4, (1, 1),
                            minval=-bound1, maxval=bound1, dtype=jnp.float32)
    w2_t = w2.T                                   # (F, 1)
    return w1_t, b1, gamma, beta, w2_t, b2


if __name__ == "__main__":
    # TODO(synk): the pandas/BERT text pipeline (get_text / get_company_name /
    # classifier) in the original forward has no tensor semantics; only the
    # fc -> bn -> fc -> bn -> last_layer numeric path is implemented here.
    key = jax.random.PRNGKey(0)
    k_x, k_p = jax.random.split(key)
    x = jax.random.normal(k_x, (BATCH, NUM_FEATURES), dtype=jnp.float32)
    params = init_params(k_p, NUM_FEATURES)

    out = neuralnet_forward(x, *params)
    out = jax.block_until_ready(out)

    # Pure-JAX reference of the same math at the original (unpadded) shapes.
    w1_t, b1, gamma, beta, w2_t, b2 = params

    def ref_block(h):
        h = jnp.maximum(h @ w1_t + b1, 0.0)
        m = h.mean(axis=0, keepdims=True)
        v = ((h - m) ** 2).mean(axis=0, keepdims=True)
        return (h - m) / jnp.sqrt(v + BN_EPS) * gamma + beta

    ref = ref_block(ref_block(x)) @ w2_t + b2
    assert out.shape == (BATCH, 1)
    assert jnp.allclose(out, ref, atol=1e-4, rtol=1e-4)

    print("KERNEL_OK")
</pallas_src>

<mosaic_0001>
module attributes {stable_mosaic.version = 11 : i64} {
  func.func @neuralnet_kernel(%arg0: memref<8x128xf32, #tpu.memory_space<vmem>>, %arg1: memref<128x128xf32, #tpu.memory_space<vmem>>, %arg2: memref<1x128xf32, #tpu.memory_space<vmem>>, %arg3: memref<1x128xf32, #tpu.memory_space<vmem>>, %arg4: memref<1x128xf32, #tpu.memory_space<vmem>>, %arg5: memref<128x128xf32, #tpu.memory_space<vmem>>, %arg6: memref<1xi32, #tpu.memory_space<smem>>, %arg7: memref<1xf32, #tpu.memory_space<smem>>, %arg8: memref<8x128xf32, #tpu.memory_space<vmem>>) attributes {dimension_semantics = [], scalar_prefetch = 0 : i64, scratch_operands = 0 : i64, tpu.core_type = #tpu.core_type<tc>} {
    %c0 = arith.constant 0 : index
    %c0_0 = arith.constant 0 : index
    %0 = vector.load %arg0[%c0, %c0_0] : memref<8x128xf32, #tpu.memory_space<vmem>>, vector<8x128xf32>
    %c0_1 = arith.constant 0 : index
    %c0_2 = arith.constant 0 : index
    %1 = vector.load %arg1[%c0_1, %c0_2] : memref<128x128xf32, #tpu.memory_space<vmem>>, vector<128x128xf32>
    %c0_3 = arith.constant 0 : index
    %c0_4 = arith.constant 0 : index
    %2 = vector.load %arg2[%c0_3, %c0_4] : memref<1x128xf32, #tpu.memory_space<vmem>>, vector<1x128xf32>
    %c0_5 = arith.constant 0 : index
    %c0_6 = arith.constant 0 : index
    %3 = vector.load %arg3[%c0_5, %c0_6] : memref<1x128xf32, #tpu.memory_space<vmem>>, vector<1x128xf32>
    %c0_7 = arith.constant 0 : index
    %c0_8 = arith.constant 0 : index
    %4 = vector.load %arg4[%c0_7, %c0_8] : memref<1x128xf32, #tpu.memory_space<vmem>>, vector<1x128xf32>
    %c0_9 = arith.constant 0 : index
    %5 = memref.load %arg6[%c0_9] : memref<1xi32, #tpu.memory_space<smem>>
    %6 = arith.sitofp %5 : i32 to f32
    %cst = arith.constant 1.000000e+00 : f32
    %7 = arith.divf %cst, %6 : f32
    %8 = tpu.iota {dimensions = array<i32: 0>} : vector<8x128xi32>
    %9 = vector.broadcast %5 : i32 to vector<8x128xi32>
    %10 = arith.cmpi slt, %8, %9 : vector<8x128xi32>
    %11 = arith.extui %10 : vector<8x128xi1> to vector<8x128xi32>
    %12 = arith.sitofp %11 : vector<8x128xi32> to vector<8x128xf32>
    %cst_10 = arith.constant dense<0.000000e+00> : vector<8x128xf32>
    %13 = tpu.matmul %0, %1, %cst_10 {dimension_numbers = #tpu.dot_dimension_numbers<[1], [0], [0], [1], [0, 0, 1, 1], [], []>} : vector<8x128xf32>, vector<128x128xf32>, vector<8x128xf32> -> vector<8x128xf32>
    %14 = vector.broadcast %2 : vector<1x128xf32> to vector<8x128xf32>
    %15 = arith.addf %13, %14 : vector<8x128xf32>
    %cst_11 = arith.constant 0.000000e+00 : f32
    %16 = vector.broadcast %cst_11 : f32 to vector<8x128xf32>
    %17 = arith.maximumf %15, %16 : vector<8x128xf32>
    %18 = arith.mulf %17, %12 : vector<8x128xf32>
    %cst_12 = arith.constant dense<0.000000e+00> : vector<128xf32>
    %19 = vector.multi_reduction <add>, %18, %cst_12 [0] : vector<8x128xf32> to vector<128xf32>
    %20 = vector.shape_cast %19 : vector<128xf32> to vector<1x128xf32>
    %21 = vector.broadcast %7 : f32 to vector<1x128xf32>
    %22 = arith.mulf %20, %21 : vector<1x128xf32>
    %23 = arith.mulf %18, %18 : vector<8x128xf32>
    %cst_13 = arith.constant dense<0.000000e+00> : vector<128xf32>
    %24 = vector.multi_reduction <add>, %23, %cst_13 [0] : vector<8x128xf32> to vector<128xf32>
    %25 = vector.shape_cast %24 : vector<128xf32> to vector<1x128xf32>
    %26 = vector.broadcast %7 : f32 to vector<1x128xf32>
    %27 = arith.mulf %25, %26 : vector<1x128xf32>
    %28 = arith.mulf %22, %22 : vector<1x128xf32>
    %29 = arith.subf %27, %28 : vector<1x128xf32>
    %cst_14 = arith.constant 9.99999974E-6 : f32
    %30 = vector.broadcast %cst_14 : f32 to vector<1x128xf32>
    %31 = arith.addf %29, %30 : vector<1x128xf32>
    %32 = math.rsqrt %31 : vector<1x128xf32>
    %33 = arith.mulf %3, %32 : vector<1x128xf32>
    %34 = arith.mulf %22, %33 : vector<1x128xf32>
    %35 = arith.subf %4, %34 : vector<1x128xf32>
    %36 = vector.broadcast %33 : vector<1x128xf32> to vector<8x128xf32>
    %37 = arith.mulf %17, %36 : vector<8x128xf32>
    %38 = vector.broadcast %35 : vector<1x128xf32> to vector<8x128xf32>
    %39 = arith.addf %37, %38 : vector<8x128xf32>
    %cst_15 = arith.constant dense<0.000000e+00> : vector<8x128xf32>
    %40 = tpu.matmul %39, %1, %cst_15 {dimension_numbers = #tpu.dot_dimension_numbers<[1], [0], [0], [1], [0, 0, 1, 1], [], []>} : vector<8x128xf32>, vector<128x128xf32>, vector<8x128xf32> -> vector<8x128xf32>
    %41 = vector.broadcast %2 : vector<1x128xf32> to vector<8x128xf32>
    %42 = arith.addf %40, %41 : vector<8x128xf32>
    %cst_16 = arith.constant 0.000000e+00 : f32
    %43 = vector.broadcast %cst_16 : f32 to vector<8x128xf32>
    %44 = arith.maximumf %42, %43 : vector<8x128xf32>
    %45 = arith.mulf %44, %12 : vector<8x128xf32>
    %cst_17 = arith.constant dense<0.000000e+00> : vector<128xf32>
    %46 = vector.multi_reduction <add>, %45, %cst_17 [0] : vector<8x128xf32> to vector<128xf32>
    %47 = vector.shape_cast %46 : vector<128xf32> to vector<1x128xf32>
    %48 = vector.broadcast %7 : f32 to vector<1x128xf32>
    %49 = arith.mulf %47, %48 : vector<1x128xf32>
    %50 = arith.mulf %45, %45 : vector<8x128xf32>
    %cst_18 = arith.constant dense<0.000000e+00> : vector<128xf32>
    %51 = vector.multi_reduction <add>, %50, %cst_18 [0] : vector<8x128xf32> to vector<128xf32>
    %52 = vector.shape_cast %51 : vector<128xf32> to vector<1x128xf32>
    %53 = vector.broadcast %7 : f32 to vector<1x128xf32>
    %54 = arith.mulf %52, %53 : vector<1x128xf32>
    %55 = arith.mulf %49, %49 : vector<1x128xf32>
    %56 = arith.subf %54, %55 : vector<1x128xf32>
    %cst_19 = arith.constant 9.99999974E-6 : f32
    %57 = vector.broadcast %cst_19 : f32 to vector<1x128xf32>
    %58 = arith.addf %56, %57 : vector<1x128xf32>
    %59 = math.rsqrt %58 : vector<1x128xf32>
    %60 = arith.mulf %3, %59 : vector<1x128xf32>
    %61 = arith.mulf %49, %60 : vector<1x128xf32>
    %62 = arith.subf %4, %61 : vector<1x128xf32>
    %63 = vector.broadcast %60 : vector<1x128xf32> to vector<8x128xf32>
    %64 = arith.mulf %44, %63 : vector<8x128xf32>
    %65 = vector.broadcast %62 : vector<1x128xf32> to vector<8x128xf32>
    %66 = arith.addf %64, %65 : vector<8x128xf32>
    %c0_20 = arith.constant 0 : index
    %c0_21 = arith.constant 0 : index
    %67 = vector.load %arg5[%c0_20, %c0_21] : memref<128x128xf32, #tpu.memory_space<vmem>>, vector<128x128xf32>
    %cst_22 = arith.constant dense<0.000000e+00> : vector<8x128xf32>
    %68 = tpu.matmul %66, %67, %cst_22 {dimension_numbers = #tpu.dot_dimension_numbers<[1], [0], [0], [1], [0, 0, 1, 1], [], []>} : vector<8x128xf32>, vector<128x128xf32>, vector<8x128xf32> -> vector<8x128xf32>
    %c0_23 = arith.constant 0 : index
    %69 = memref.load %arg7[%c0_23] : memref<1xf32, #tpu.memory_space<smem>>
    %70 = vector.broadcast %69 : f32 to vector<8x128xf32>
    %71 = arith.addf %68, %70 : vector<8x128xf32>
    %c0_24 = arith.constant 0 : index
    %c0_25 = arith.constant 0 : index
    %72 = vector.load %arg8[%c0_24, %c0_25] : memref<8x128xf32, #tpu.memory_space<vmem>>, vector<8x128xf32>
    tpu.vector_store %arg8[%c0_24, %c0_25], %71 {strides = array<i32>} : memref<8x128xf32, #tpu.memory_space<vmem>>, vector<8x128xf32>,
    return
  }
}

</mosaic_0001>

<llo_original>
// kernel: neuralnet_forward.1
$region0: #{neuralnet_forward.1}
  #allocation0 [shape = 'u32[]', space=smem, size = 0x4, offset = 0x4, fixed_abs, tag = 'smem constant byte address 0x4 - core index']
  #allocation1 [shape = 'u32[144,128]{1,0:T(1,128)}', space=vmem, size = 0x12000, scoped, tag = 'internal scratch']
  #allocation2 [shape = 's32[1]{0:T(128)S(6)}', space=smem, size = 0x200, scoped, tag = 'scoped memory for neuralnet_forward.1']
  #allocation3 [shape = 'f32[1]{0:T(128)S(6)}', space=smem, size = 0x200, scoped, tag = 'scoped memory for neuralnet_forward.1']
  %s0 = inlined_call_operand.vmem [shape: f32[8,128], index: 0, kind: input, shape index: {}]
  %s1 = inlined_call_operand.vmem [shape: f32[128,128], index: 1, kind: input, shape index: {}]
  %s2 = inlined_call_operand.vmem [shape: f32[1,128], index: 2, kind: input, shape index: {}]
  %s3 = inlined_call_operand.vmem [shape: f32[1,128], index: 3, kind: input, shape index: {}]
  %s4 = inlined_call_operand.vmem [shape: f32[1,128], index: 4, kind: input, shape index: {}]
  %s5 = inlined_call_operand.vmem [shape: f32[128,128], index: 5, kind: input, shape index: {}]
  %s6 = inlined_call_operand.<no memory space> [shape: s32[1], index: 6, kind: input, shape index: {}]
  %s7 = inlined_call_operand.<no memory space> [shape: f32[1], index: 7, kind: input, shape index: {}]
  %s8 = inlined_call_operand.vmem [shape: f32[8,128], index: 8, kind: output, shape index: {}]
  %s9 = sld [smem:[#allocation0]]
  $region42: #{neuralnet_forward.1} parent=0
    _
  %s11 = ssub.s32 1, %s9
  %s12 = scalar_select 0, %s11, %s9
  %13 = sst [smem:[#allocation2]] %s6
  %14 = sst [smem:[#allocation3]] %s7
  // Predicated region
  $region2: #{neuralnet_forward.1} parent=0 // pred_check
    _
  $region3: #{neuralnet_forward.1} parent=0 // pred_check_branch
    %16 = sbr.rel (0) target = $region5
  $region4: #{neuralnet_forward.1} parent=0 // pred_region
    _
  $region5: #{neuralnet_forward.1} parent=0 // pred_fallthru
    _
  // Predicated region
  $region6: #{neuralnet_forward.1} parent=0 // pred_check
    _
  $region7: #{neuralnet_forward.1} parent=0 // pred_check_branch
    %18 = sbr.rel (0) target = $region9
  $region8: #{neuralnet_forward.1} parent=0 // pred_region
    _
  $region9: #{neuralnet_forward.1} parent=0 // pred_fallthru
    _
  // Predicated region
  $region10: #{neuralnet_forward.1} parent=0 // pred_check
    _
  $region11: #{neuralnet_forward.1} parent=0 // pred_check_branch
    %20 = sbr.rel (0) target = $region13
  $region12: #{neuralnet_forward.1} parent=0 // pred_region
    _
  $region13: #{neuralnet_forward.1} parent=0 // pred_fallthru
    _
  // Predicated region
  $region14: #{neuralnet_forward.1} parent=0 // pred_check
    _
  $region15: #{neuralnet_forward.1} parent=0 // pred_check_branch
    %22 = sbr.rel (0) target = $region17
  $region16: #{neuralnet_forward.1} parent=0 // pred_region
    _
  $region17: #{neuralnet_forward.1} parent=0 // pred_fallthru
    _
  // Predicated region
  $region18: #{neuralnet_forward.1} parent=0 // pred_check
    _
  $region19: #{neuralnet_forward.1} parent=0 // pred_check_branch
    %24 = sbr.rel (0) target = $region21
  $region20: #{neuralnet_forward.1} parent=0 // pred_region
    _
  $region21: #{neuralnet_forward.1} parent=0 // pred_fallthru
    _
  // Predicated region
  $region22: #{neuralnet_forward.1} parent=0 // pred_check
    _
  $region23: #{neuralnet_forward.1} parent=0 // pred_check_branch
    %26 = sbr.rel (0) target = $region25
  $region24: #{neuralnet_forward.1} parent=0 // pred_region
    _
  $region25: #{neuralnet_forward.1} parent=0 // pred_fallthru
    _
  // Predicated region
  $region26: #{neuralnet_forward.1} parent=0 // pred_check
    _
  $region27: #{neuralnet_forward.1} parent=0 // pred_check_branch
    %28 = sbr.rel (0) target = $region29
  $region28: #{neuralnet_forward.1} parent=0 // pred_region
    _
  $region29: #{neuralnet_forward.1} parent=0 // pred_fallthru
    _
  // Predicated region
  $region30: #{neuralnet_forward.1} parent=0 // pred_check
    _
  $region31: #{neuralnet_forward.1} parent=0 // pred_check_branch
    %30 = sbr.rel (0) target = $region33
  $region32: #{neuralnet_forward.1} parent=0 // pred_region
    _
  $region33: #{neuralnet_forward.1} parent=0 // pred_fallthru
    _
  %v31 = vld [vmem:[%s0] sm:$0xff]
  %v32 = vld [vmem:[%s1] sm:$0xff]
  %v33 = vld [vmem:[%s1 + $0x8] sm:$0xff]
  %v34 = vld [vmem:[%s1 + $0x10] sm:$0xff]
  %v35 = vld [vmem:[%s1 + $0x18] sm:$0xff]
  %v36 = vld [vmem:[%s1 + $0x20] sm:$0xff]
  %v37 = vld [vmem:[%s1 + $0x28] sm:$0xff]
  %v38 = vld [vmem:[%s1 + $0x30] sm:$0xff]
  %v39 = vld [vmem:[%s1 + $0x38] sm:$0xff]
  %v40 = vld [vmem:[%s1 + $0x40] sm:$0xff]
  %v41 = vld [vmem:[%s1 + $0x48] sm:$0xff]
  %v42 = vld [vmem:[%s1 + $0x50] sm:$0xff]
  %v43 = vld [vmem:[%s1 + $0x58] sm:$0xff]
  %v44 = vld [vmem:[%s1 + $0x60] sm:$0xff]
  %v45 = vld [vmem:[%s1 + $0x68] sm:$0xff]
  %v46 = vld [vmem:[%s1 + $0x70] sm:$0xff]
  %v47 = vld [vmem:[%s1 + $0x78] sm:$0xff]
  %v48 = vld [vmem:[%s2] sm:$0x1]
  %v49 = vld [vmem:[%s3] sm:$0x1]
  %v50 = vld [vmem:[%s4] sm:$0x1]
  %s51 = sld [smem:[#allocation2]]
  %s52 = scvt.s32.f32 %s51
  %v53 = vstv %s52
  %v54 = vrcp.pop %v53
  %s55 = vtos %v54
  %v56 = vlaneseq
  %v57 = vshrl.u32 %v56, 7
  %v58 = vstv %s51
  %vm59 = vcmp.lt.s32.totalorder %v57, %v58
  %v60 = vsel %vm59, 1, 0
  %v61 = vcvt.s32.f32 %v60
  %v63 = vlaneseq
  %v64 = vshrl.u32 %v63, 7
  %v65 = vsub.s32 0, %v64
  %v66 = vrot.slane %v48, %v65
  %68 = vmatprep.subr.mxu0 0.0
  %69 = vmatpush1.msra.mxu0 %v47
  %70 = vmatprep.subr.mxu0 0.0
  %71 = vmatpush1.msra.mxu0 %v46
  %72 = vmatprep.subr.mxu0 0.0
  %73 = vmatpush1.msra.mxu0 %v45
  %74 = vmatprep.subr.mxu0 0.0
  %75 = vmatpush1.msra.mxu0 %v44
  %76 = vmatprep.subr.mxu0 0.0
  %77 = vmatpush1.msra.mxu0 %v43
  %78 = vmatprep.subr.mxu0 0.0
  %79 = vmatpush1.msra.mxu0 %v42
  %80 = vmatprep.subr.mxu0 0.0
  %81 = vmatpush1.msra.mxu0 %v41
  %82 = vmatprep.subr.mxu0 0.0
  %83 = vmatpush1.msra.mxu0 %v40
  %84 = vmatprep.subr.mxu0 0.0
  %85 = vmatpush1.msra.mxu0 %v39
  %86 = vmatprep.subr.mxu0 0.0
  %87 = vmatpush1.msra.mxu0 %v38
  %88 = vmatprep.subr.mxu0 0.0
  %89 = vmatpush1.msra.mxu0 %v37
  %90 = vmatprep.subr.mxu0 0.0
  %91 = vmatpush1.msra.mxu0 %v36
  %92 = vmatprep.subr.mxu0 0.0
  %93 = vmatpush1.msra.mxu0 %v35
  %94 = vmatprep.subr.mxu0 0.0
  %95 = vmatpush1.msra.mxu0 %v34
  %96 = vmatprep.subr.mxu0 0.0
  %97 = vmatpush1.msra.mxu0 %v33
  %98 = vmatprep.subr.mxu0 0.0
  %99 = vmatpush1.msra.mxu0 %v32
  %100 = vmatprep.subr.mxu0 0.0
  %101 = vmatpush2.msra.mxu0 0.0
  %102 = vmatprep.subr.mxu0 0.0
  %103 = vmatpush2.msra.mxu0 0.0
  %104 = vmatprep.subr.mxu0 0.0
  %105 = vmatpush2.msra.mxu0 0.0
  %106 = vmatprep.subr.mxu0 0.0
  %107 = vmatpush2.msra.mxu0 0.0
  %108 = vmatprep.subr.mxu0 0.0
  %109 = vmatpush2.msra.mxu0 0.0
  %110 = vmatprep.subr.mxu0 0.0
  %111 = vmatpush2.msra.mxu0 0.0
  %112 = vmatprep.subr.mxu0 0.0
  %113 = vmatpush2.msra.mxu0 0.0
  %114 = vmatprep.subr.mxu0 0.0
  %115 = vmatpush2.msra.mxu0 0.0
  %116 = vmatprep.subr.mxu0 0.0
  %117 = vmatpush2.msra.mxu0 0.0
  %118 = vmatprep.subr.mxu0 0.0
  %119 = vmatpush2.msra.mxu0 0.0
  %120 = vmatprep.subr.mxu0 0.0
  %121 = vmatpush2.msra.mxu0 0.0
  %122 = vmatprep.subr.mxu0 0.0
  %123 = vmatpush2.msra.mxu0 0.0
  %124 = vmatprep.subr.mxu0 0.0
  %125 = vmatpush2.msra.mxu0 0.0
  %126 = vmatprep.subr.mxu0 0.0
  %127 = vmatpush2.msra.mxu0 0.0
  %128 = vmatprep.subr.mxu0 0.0
  %129 = vmatpush2.msra.mxu0 0.0
  %130 = vmatprep.subr.mxu0 0.0
  %131 = vmatpush2.msra.mxu0 0.0
  %132 = vmatprep.mubr.f32.mxu0 0.0
  %133 = vmatmul.mubr.f32.gmra.mxu0 %v31
  %v134 = vpop.f32.mrf.mxu0
  %v135 = vadd.f32 %v66, %v134
  %v136 = vpop.f32.mrf.mxu0
  %137 = vdwg.mxu0
  %v138 = vmax.f32 %v135, 0.0
  %v139 = vmul.f32 %v138, %v61
  %v140 = vrot.slane %v139, 4
  %v141 = vadd.f32 %v139, %v140
  %v142 = vrot.slane %v141, 2
  %v143 = vadd.f32 %v141, %v142
  %v144 = vrot.slane %v143, 1
  %v145 = vadd.f32 %v143, %v144
  %v146 = vstv %s55
  %v147 = vmul.f32 %v145, %v146
  %v148 = vmul.f32 %v139, %v139
  %v149 = vrot.slane %v148, 4
  %v150 = vadd.f32 %v148, %v149
  %v151 = vrot.slane %v150, 2
  %v152 = vadd.f32 %v150, %v151
  %v153 = vrot.slane %v152, 1
  %v154 = vadd.f32 %v152, %v153
  %v155 = vmul.f32 %v154, %v146
  %v156 = vmul.f32 %v147, %v147
  %v157 = vsub.f32 %v155, %v156
  %v158 = vadd.f32 %v157, 1e-05
  %v159 = vrsqrt.pop %v158
  %v160 = vmul.f32 %v49, %v159
  %v161 = vmul.f32 %v147, %v160
  %v162 = vsub.f32 %v50, %v161
  %v164 = vlaneseq
  %v165 = vshrl.u32 %v164, 7
  %v166 = vsub.s32 0, %v165
  %v167 = vrot.slane %v160, %v166
  %v169 = vmul.f32 %v138, %v167
  %v171 = vlaneseq
  %v172 = vshrl.u32 %v171, 7
  %v173 = vsub.s32 0, %v172
  %v174 = vrot.slane %v162, %v173
  %v176 = vadd.f32 %v169, %v174
  %177 = vmatprep.subr.mxu0 0.0
  %178 = vmatpush1.msra.mxu0 %v47
  %179 = vmatprep.subr.mxu0 0.0
  %180 = vmatpush1.msra.mxu0 %v46
  %181 = vmatprep.subr.mxu0 0.0
  %182 = vmatpush1.msra.mxu0 %v45
  %183 = vmatprep.subr.mxu0 0.0
  %184 = vmatpush1.msra.mxu0 %v44
  %185 = vmatprep.subr.mxu0 0.0
  %186 = vmatpush1.msra.mxu0 %v43
  %187 = vmatprep.subr.mxu0 0.0
  %188 = vmatpush1.msra.mxu0 %v42
  %189 = vmatprep.subr.mxu0 0.0
  %190 = vmatpush1.msra.mxu0 %v41
  %191 = vmatprep.subr.mxu0 0.0
  %192 = vmatpush1.msra.mxu0 %v40
  %193 = vmatprep.subr.mxu0 0.0
  %194 = vmatpush1.msra.mxu0 %v39
  %195 = vmatprep.subr.mxu0 0.0
  %196 = vmatpush1.msra.mxu0 %v38
  %197 = vmatprep.subr.mxu0 0.0
  %198 = vmatpush1.msra.mxu0 %v37
  %199 = vmatprep.subr.mxu0 0.0
  %200 = vmatpush1.msra.mxu0 %v36
  %201 = vmatprep.subr.mxu0 0.0
  %202 = vmatpush1.msra.mxu0 %v35
  %203 = vmatprep.subr.mxu0 0.0
  %204 = vmatpush1.msra.mxu0 %v34
  %205 = vmatprep.subr.mxu0 0.0
  %206 = vmatpush1.msra.mxu0 %v33
  %207 = vmatprep.subr.mxu0 0.0
  %208 = vmatpush1.msra.mxu0 %v32
  %209 = vmatprep.subr.mxu0 0.0
  %210 = vmatpush2.msra.mxu0 0.0
  %211 = vmatprep.subr.mxu0 0.0
  %212 = vmatpush2.msra.mxu0 0.0
  %213 = vmatprep.subr.mxu0 0.0
  %214 = vmatpush2.msra.mxu0 0.0
  %215 = vmatprep.subr.mxu0 0.0
  %216 = vmatpush2.msra.mxu0 0.0
  %217 = vmatprep.subr.mxu0 0.0
  %218 = vmatpush2.msra.mxu0 0.0
  %219 = vmatprep.subr.mxu0 0.0
  %220 = vmatpush2.msra.mxu0 0.0
  %221 = vmatprep.subr.mxu0 0.0
  %222 = vmatpush2.msra.mxu0 0.0
  %223 = vmatprep.subr.mxu0 0.0
  %224 = vmatpush2.msra.mxu0 0.0
  %225 = vmatprep.subr.mxu0 0.0
  %226 = vmatpush2.msra.mxu0 0.0
  %227 = vmatprep.subr.mxu0 0.0
  %228 = vmatpush2.msra.mxu0 0.0
  %229 = vmatprep.subr.mxu0 0.0
  %230 = vmatpush2.msra.mxu0 0.0
  %231 = vmatprep.subr.mxu0 0.0
  %232 = vmatpush2.msra.mxu0 0.0
  %233 = vmatprep.subr.mxu0 0.0
  %234 = vmatpush2.msra.mxu0 0.0
  %235 = vmatprep.subr.mxu0 0.0
  %236 = vmatpush2.msra.mxu0 0.0
  %237 = vmatprep.subr.mxu0 0.0
  %238 = vmatpush2.msra.mxu0 0.0
  %239 = vmatprep.subr.mxu0 0.0
  %240 = vmatpush2.msra.mxu0 0.0
  %241 = vmatprep.mubr.f32.mxu0 0.0
  %242 = vmatmul.mubr.f32.gmra.mxu0 %v176
  %v243 = vpop.f32.mrf.mxu0
  %v244 = vadd.f32 %v66, %v243
  %v245 = vpop.f32.mrf.mxu0
  %246 = vdwg.mxu0
  %v247 = vmax.f32 %v244, 0.0
  %v248 = vmul.f32 %v247, %v61
  %v249 = vrot.slane %v248, 4
  %v250 = vadd.f32 %v248, %v249
  %v251 = vrot.slane %v250, 2
  %v252 = vadd.f32 %v250, %v251
  %v253 = vrot.slane %v252, 1
  %v254 = vadd.f32 %v252, %v253
  %v255 = vmul.f32 %v254, %v146
  %v256 = vmul.f32 %v248, %v248
  %v257 = vrot.slane %v256, 4
  %v258 = vadd.f32 %v256, %v257
  %v259 = vrot.slane %v258, 2
  %v260 = vadd.f32 %v258, %v259
  %v261 = vrot.slane %v260, 1
  %v262 = vadd.f32 %v260, %v261
  %v263 = vmul.f32 %v262, %v146
  %v264 = vmul.f32 %v255, %v255
  %v265 = vsub.f32 %v263, %v264
  %v266 = vadd.f32 %v265, 1e-05
  %v267 = vrsqrt.pop %v266
  %v268 = vmul.f32 %v49, %v267
  %v269 = vmul.f32 %v255, %v268
  %v270 = vsub.f32 %v50, %v269
  %v272 = vlaneseq
  %v273 = vshrl.u32 %v272, 7
  %v274 = vsub.s32 0, %v273
  %v275 = vrot.slane %v268, %v274
  %v277 = vmul.f32 %v247, %v275
  %v279 = vlaneseq
  %v280 = vshrl.u32 %v279, 7
  %v281 = vsub.s32 0, %v280
  %v282 = vrot.slane %v270, %v281
  %v284 = vadd.f32 %v277, %v282
  %v285 = vld [vmem:[%s5] sm:$0xff]
  %v286 = vld [vmem:[%s5 + $0x8] sm:$0xff]
  %v287 = vld [vmem:[%s5 + $0x10] sm:$0xff]
  %v288 = vld [vmem:[%s5 + $0x18] sm:$0xff]
  %v289 = vld [vmem:[%s5 + $0x20] sm:$0xff]
  %v290 = vld [vmem:[%s5 + $0x28] sm:$0xff]
  %v291 = vld [vmem:[%s5 + $0x30] sm:$0xff]
  %v292 = vld [vmem:[%s5 + $0x38] sm:$0xff]
  %v293 = vld [vmem:[%s5 + $0x40] sm:$0xff]
  %v294 = vld [vmem:[%s5 + $0x48] sm:$0xff]
  %v295 = vld [vmem:[%s5 + $0x50] sm:$0xff]
  %v296 = vld [vmem:[%s5 + $0x58] sm:$0xff]
  %v297 = vld [vmem:[%s5 + $0x60] sm:$0xff]
  %v298 = vld [vmem:[%s5 + $0x68] sm:$0xff]
  %v299 = vld [vmem:[%s5 + $0x70] sm:$0xff]
  %v300 = vld [vmem:[%s5 + $0x78] sm:$0xff]
  %s301 = sld [smem:[#allocation3]]
  %v302 = vstv %s301
  %303 = vmatprep.subr.mxu0 0.0
  %304 = vmatpush1.msra.mxu0 %v300
  %305 = vmatprep.subr.mxu0 0.0
  %306 = vmatpush1.msra.mxu0 %v299
  %307 = vmatprep.subr.mxu0 0.0
  %308 = vmatpush1.msra.mxu0 %v298
  %309 = vmatprep.subr.mxu0 0.0
  %310 = vmatpush1.msra.mxu0 %v297
  %311 = vmatprep.subr.mxu0 0.0
  %312 = vmatpush1.msra.mxu0 %v296
  %313 = vmatprep.subr.mxu0 0.0
  %314 = vmatpush1.msra.mxu0 %v295
  %315 = vmatprep.subr.mxu0 0.0
  %316 = vmatpush1.msra.mxu0 %v294
  %317 = vmatprep.subr.mxu0 0.0
  %318 = vmatpush1.msra.mxu0 %v293
  %319 = vmatprep.subr.mxu0 0.0
  %320 = vmatpush1.msra.mxu0 %v292
  %321 = vmatprep.subr.mxu0 0.0
  %322 = vmatpush1.msra.mxu0 %v291
  %323 = vmatprep.subr.mxu0 0.0
  %324 = vmatpush1.msra.mxu0 %v290
  %325 = vmatprep.subr.mxu0 0.0
  %326 = vmatpush1.msra.mxu0 %v289
  %327 = vmatprep.subr.mxu0 0.0
  %328 = vmatpush1.msra.mxu0 %v288
  %329 = vmatprep.subr.mxu0 0.0
  %330 = vmatpush1.msra.mxu0 %v287
  %331 = vmatprep.subr.mxu0 0.0
  %332 = vmatpush1.msra.mxu0 %v286
  %333 = vmatprep.subr.mxu0 0.0
  %334 = vmatpush1.msra.mxu0 %v285
  %335 = vmatprep.subr.mxu0 0.0
  %336 = vmatpush2.msra.mxu0 0.0
  %337 = vmatprep.subr.mxu0 0.0
  %338 = vmatpush2.msra.mxu0 0.0
  %339 = vmatprep.subr.mxu0 0.0
  %340 = vmatpush2.msra.mxu0 0.0
  %341 = vmatprep.subr.mxu0 0.0
  %342 = vmatpush2.msra.mxu0 0.0
  %343 = vmatprep.subr.mxu0 0.0
  %344 = vmatpush2.msra.mxu0 0.0
  %345 = vmatprep.subr.mxu0 0.0
  %346 = vmatpush2.msra.mxu0 0.0
  %347 = vmatprep.subr.mxu0 0.0
  %348 = vmatpush2.msra.mxu0 0.0
  %349 = vmatprep.subr.mxu0 0.0
  %350 = vmatpush2.msra.mxu0 0.0
  %351 = vmatprep.subr.mxu0 0.0
  %352 = vmatpush2.msra.mxu0 0.0
  %353 = vmatprep.subr.mxu0 0.0
  %354 = vmatpush2.msra.mxu0 0.0
  %355 = vmatprep.subr.mxu0 0.0
  %356 = vmatpush2.msra.mxu0 0.0
  %357 = vmatprep.subr.mxu0 0.0
  %358 = vmatpush2.msra.mxu0 0.0
  %359 = vmatprep.subr.mxu0 0.0
  %360 = vmatpush2.msra.mxu0 0.0
  %361 = vmatprep.subr.mxu0 0.0
  %362 = vmatpush2.msra.mxu0 0.0
  %363 = vmatprep.subr.mxu0 0.0
  %364 = vmatpush2.msra.mxu0 0.0
  %365 = vmatprep.subr.mxu0 0.0
  %366 = vmatpush2.msra.mxu0 0.0
  %367 = vmatprep.mubr.f32.mxu0 0.0
  %368 = vmatmul.mubr.f32.gmra.mxu0 %v284
  %v369 = vpop.f32.mrf.mxu0
  %v370 = vadd.f32 %v302, %v369
  %v371 = vpop.f32.mrf.mxu0
  %372 = vdwg.mxu0
  %373 = vst [vmem:[%s8] sm:$0xff] %v370
  // Predicated region
  $region34: #{neuralnet_forward.1} parent=0 // pred_check
    _
  $region35: #{neuralnet_forward.1} parent=0 // pred_check_branch
    %375 = sbr.rel (0) target = $region37
  $region36: #{neuralnet_forward.1} parent=0 // pred_region
    _
  $region37: #{neuralnet_forward.1} parent=0 // pred_fallthru
    _
  // Predicated region
  $region38: #{neuralnet_forward.1} parent=0 // pred_check
    _
  $region39: #{neuralnet_forward.1} parent=0 // pred_check_branch
    %377 = sbr.rel (0) target = $region41
  $region40: #{neuralnet_forward.1} parent=0 // pred_region
    _
  $region41: #{neuralnet_forward.1} parent=0 // pred_fallthru
    _

</llo_original>
